<compile_context>
chip_gen: v6e
topology: v6e:2x2x1
jax: 0.10.0
libtpu: 0.0.40
codegen_flags: <defaults>
</compile_context>

<pallas_src>
import functools

import jax
import jax.numpy as jnp
from jax.experimental import pallas as pl
from jax.experimental.pallas import tpu as pltpu

_LANES = 128
_DEFAULT_MAX_ROW_CHUNK = 2048  # (2048,128) f32 = 1 MiB/input; x5 inputs x2 buffers = 10 MiB.


def _as_f32(x):
    x = jnp.asarray(x)
    return x if x.dtype == jnp.float32 else x.astype(jnp.float32)


def _round_up(x, m):
    return -(-x // m) * m


def _lagrange_kernel(lm_eq_ref, eq_ref, lm_geq_ref, slack_ref, geq_ref, out_ref,
                     *, rows_valid, row_chunk, chunks_per_core, apply_row_mask):
    c = pl.program_id(0)   # (mega)core axis, "parallel"
    j = pl.program_id(1)   # row-chunk axis, "arbitrary" (resident accumulator)

    @pl.when(j == 0)
    def _():
        out_ref[...] = jnp.zeros_like(out_ref)

    lm_eq = lm_eq_ref[...]
    eq = eq_ref[...]
    lm_geq = lm_geq_ref[...]
    slack = slack_ref[...]
    geq = geq_ref[...]

    # Fused elementwise term; zero lane-padding makes both terms exact.
    prod = lm_eq * eq + lm_geq * (geq - slack * slack)

    if apply_row_mask:
        # Last block may extend past the array's row extent (OOB reads are
        # garbage); mask rows >= rows_valid.  rows_valid is a static constant.
        row0 = (c * chunks_per_core + j) * row_chunk
        row_ids = row0 + jax.lax.broadcasted_iota(jnp.int32, (row_chunk, _LANES), 0)
        prod = jnp.where(row_ids < rows_valid, prod, 0.0)

    # Deferred reduction: fold the (8,128) sublane tiles into the resident
    # (1,8,128) output block with pure VPU adds; no per-step XLU reduce and no
    # per-step (1,1) read-modify-write.
    full = (row_chunk // 8) * 8
    if full:
        out_ref[...] += prod[:full].reshape(full // 8, 8, _LANES).sum(axis=0)
    rem = row_chunk - full            # only possible in the single-chunk case
    if rem:
        out_ref[0:1, 0:rem, :] += prod[full:row_chunk][None, :, :]


def lagrange_constrained_loss(loss, lm_eq=None, eq_zero=None, lm_geq=None,
                              slack_vars=None, geq_zero=None, *,
                              max_row_chunk=_DEFAULT_MAX_ROW_CHUNK,
                              min_rows_for_kernel=32,
                              use_two_cores=True):
    """Forward pass of LagrangeConstrainedLoss.  `loss` is a scalar; the
    constraint / multiplier / slack vectors are 1-D."""
    loss = jnp.asarray(loss)
    have_eq = eq_zero is not None
    have_geq = geq_zero is not None
    if not have_eq and not have_geq:
        return loss

    n_eq = int(jnp.asarray(eq_zero).size) if have_eq else 0
    n_geq = int(jnp.asarray(geq_zero).size) if have_geq else 0
    n = max(n_eq, n_geq)
    rows = max(1, -(-n // _LANES))

    # Small-N fast path (and one-sided constraints): the work is a few fused
    # VPU ops, so skip the kernel boundary and let XLA fuse into the loss graph.
    if (not have_eq) or (not have_geq) or rows <= min_rows_for_kernel:
        out = _as_f32(loss)
        if have_eq:
            out = out + jnp.sum(_as_f32(lm_eq) * _as_f32(eq_zero))
        if have_geq:
            s = _as_f32(slack_vars)
            out = out + jnp.sum(_as_f32(lm_geq) * (_as_f32(geq_zero) - s * s))
        return out

    # ---------------- Pallas kernel path ----------------
    assert max_row_chunk >= 8 and max_row_chunk % 8 == 0

    if rows <= max_row_chunk:
        row_chunk, num_chunks = rows, 1            # block == full row extent
    else:
        nc = -(-rows // max_row_chunk)
        if use_two_cores:
            nc = _round_up(nc, 2)
        row_chunk = min(_round_up(-(-rows // nc), 8), max_row_chunk)
        num_chunks = -(-rows // row_chunk)         # guarantees no fully-OOB block

    num_cores = 2 if (use_two_cores and num_chunks >= 4 and num_chunks % 2 == 0) else 1
    chunks_per_core = num_chunks // num_cores
    apply_row_mask = num_chunks * row_chunk > rows

    lane_n = rows * _LANES

    def to_tiles(v):
        v = _as_f32(jnp.asarray(v).reshape(-1))
        if v.shape[0] != lane_n:
            # Zero-pad only to the next lane multiple (exact: padded multiplier
            # lanes contribute 0).  No pad / no copy when n % 128 == 0.
            v = jnp.pad(v, (0, lane_n - v.shape[0]))
        return v.reshape(rows, _LANES)             # metadata-only reshape

    ins = (to_tiles(lm_eq), to_tiles(eq_zero),
           to_tiles(lm_geq), to_tiles(slack_vars), to_tiles(geq_zero))

    kernel = functools.partial(
        _lagrange_kernel,
        rows_valid=rows, row_chunk=row_chunk,
        chunks_per_core=chunks_per_core, apply_row_mask=apply_row_mask)

    in_spec = pl.BlockSpec((row_chunk, _LANES),
                           lambda c, j: (c * chunks_per_core + j, 0))

    partials = pl.pallas_call(
        kernel,
        out_shape=jax.ShapeDtypeStruct((num_cores, 8, _LANES), jnp.float32),
        grid=(num_cores, chunks_per_core),
        in_specs=[in_spec] * 5,
        out_specs=pl.BlockSpec((1, 8, _LANES), lambda c, j: (c, 0, 0)),
        compiler_params=pltpu.CompilerParams(
            dimension_semantics=("parallel", "arbitrary"),
            vmem_limit_bytes=32 * 1024 * 1024),
    )(*ins)

    # Tiny final reduce (<= 2*1024 elements) + scalar loss done outside the kernel.
    return _as_f32(loss) + jnp.sum(partials)


def reference(loss, lm_eq, eq_zero, lm_geq, slack_vars, geq_zero):
    return (loss + jnp.sum(lm_eq * eq_zero)
            + jnp.sum(lm_geq * (geq_zero - slack_vars * slack_vars)))


if __name__ == "__main__":
    # NOTE: the backward-hook `flip` (gradient negation on the multipliers) is a
    # training-time autograd detail and does not affect the forward pass.
    def make_case(key, n):
        ks = jax.random.split(key, 6)
        lm_eq = jax.random.normal(ks[0], (n,), dtype=jnp.float32)
        lm_geq = jax.random.normal(ks[1], (n,), dtype=jnp.float32)
        slack = jax.random.normal(ks[2], (n,), dtype=jnp.float32)
        loss = jax.random.normal(ks[3], (), dtype=jnp.float32)
        eq = jax.random.normal(ks[4], (n,), dtype=jnp.float32)
        geq = jax.random.normal(ks[5], (n,), dtype=jnp.float32)
        return loss, lm_eq, eq, lm_geq, slack, geq

    def check(case, out, atol, rtol):
        ref = reference(*case)
        assert jnp.allclose(out, ref, atol=atol, rtol=rtol), (out, ref)

    k1, k2, k3, k4, k5 = jax.random.split(jax.random.PRNGKey(0), 5)

    # 1) Module-sized case (eqs_zero_len = 8): small-N fast path (pure jnp).
    case = make_case(k1, 8)
    out = jax.block_until_ready(lagrange_constrained_loss(*case))
    check(case, out, 1e-5, 1e-5)

    # 2) Same tiny case but forcing the Pallas kernel (single (1,128) block).
    out = jax.block_until_ready(
        lagrange_constrained_loss(*case, min_rows_for_kernel=0))
    check(case, out, 1e-5, 1e-5)

    # 3) Ragged n (not a multiple of 128), multiple row chunks + OOB row masking.
    case = make_case(k2, 2500)
    out = jax.block_until_ready(
        lagrange_constrained_loss(*case, min_rows_for_kernel=0, max_row_chunk=8))
    check(case, out, 1e-3, 1e-4)

    # 4) 128-aligned n (zero-copy reshape), even chunk count -> dual-core grid path.
    case = make_case(k3, 64 * 128)
    out = jax.block_until_ready(lagrange_constrained_loss(*case, max_row_chunk=8))
    check(case, out, 1e-3, 1e-4)

    # 5) Large constraint count with the default tiling (realistic kernel config).
    case = make_case(k4, 300_000)
    out = jax.block_until_ready(lagrange_constrained_loss(*case))
    check(case, out, 1e-1, 1e-3)

    print("KERNEL_OK")
</pallas_src>

<mosaic_0001>
module attributes {stable_mosaic.version = 11 : i64} {
  func.func @_lagrange_kernel(%arg0: i32, %arg1: i32, %arg2: memref<1x128xf32, #tpu.memory_space<vmem>>, %arg3: memref<1x128xf32, #tpu.memory_space<vmem>>, %arg4: memref<1x128xf32, #tpu.memory_space<vmem>>, %arg5: memref<1x128xf32, #tpu.memory_space<vmem>>, %arg6: memref<1x128xf32, #tpu.memory_space<vmem>>, %arg7: memref<1x8x128xf32, #tpu.memory_space<vmem>>) attributes {dimension_semantics = [#tpu.dimension_semantics<parallel>, #tpu.dimension_semantics<arbitrary>], iteration_bounds = array<i64: 1, 1>, scalar_prefetch = 0 : i64, scratch_operands = 0 : i64, tpu.core_type = #tpu.core_type<tc>, window_params = [{transform_indices = @transform_0, window_bounds = array<i64: 1, 128>}, {transform_indices = @transform_1, window_bounds = array<i64: 1, 128>}, {transform_indices = @transform_2, window_bounds = array<i64: 1, 128>}, {transform_indices = @transform_3, window_bounds = array<i64: 1, 128>}, {transform_indices = @transform_4, window_bounds = array<i64: 1, 128>}, {transform_indices = @transform_5, window_bounds = array<i64: 1, 8, 128>}]} {
    %c0_i32 = arith.constant 0 : i32
    %0 = arith.cmpi eq, %arg1, %c0_i32 : i32
    %1 = arith.extui %0 : i1 to i32
    %c0_i32_0 = arith.constant 0 : i32
    %2 = arith.cmpi ne, %1, %c0_i32_0 : i32
    scf.if %2 {
      %cst = arith.constant 0.000000e+00 : f32
      %17 = vector.broadcast %cst : f32 to vector<1x8x128xf32>
      %c0_16 = arith.constant 0 : index
      %c0_17 = arith.constant 0 : index
      %c0_18 = arith.constant 0 : index
      %18 = vector.load %arg7[%c0_16, %c0_17, %c0_18] : memref<1x8x128xf32, #tpu.memory_space<vmem>>, vector<1x8x128xf32>
      tpu.vector_store %arg7[%c0_16, %c0_17, %c0_18], %17 {strides = array<i32>} : memref<1x8x128xf32, #tpu.memory_space<vmem>>, vector<1x8x128xf32>,
    } else {
    }
    %c0 = arith.constant 0 : index
    %c0_1 = arith.constant 0 : index
    %3 = vector.load %arg2[%c0, %c0_1] : memref<1x128xf32, #tpu.memory_space<vmem>>, vector<1x128xf32>
    %c0_2 = arith.constant 0 : index
    %c0_3 = arith.constant 0 : index
    %4 = vector.load %arg3[%c0_2, %c0_3] : memref<1x128xf32, #tpu.memory_space<vmem>>, vector<1x128xf32>
    %c0_4 = arith.constant 0 : index
    %c0_5 = arith.constant 0 : index
    %5 = vector.load %arg4[%c0_4, %c0_5] : memref<1x128xf32, #tpu.memory_space<vmem>>, vector<1x128xf32>
    %c0_6 = arith.constant 0 : index
    %c0_7 = arith.constant 0 : index
    %6 = vector.load %arg5[%c0_6, %c0_7] : memref<1x128xf32, #tpu.memory_space<vmem>>, vector<1x128xf32>
    %c0_8 = arith.constant 0 : index
    %c0_9 = arith.constant 0 : index
    %7 = vector.load %arg6[%c0_8, %c0_9] : memref<1x128xf32, #tpu.memory_space<vmem>>, vector<1x128xf32>
    %8 = arith.mulf %3, %4 : vector<1x128xf32>
    %9 = arith.mulf %6, %6 : vector<1x128xf32>
    %10 = arith.subf %7, %9 : vector<1x128xf32>
    %11 = arith.mulf %5, %10 : vector<1x128xf32>
    %12 = arith.addf %8, %11 : vector<1x128xf32>
    %c0_10 = arith.constant 0 : index
    %c0_11 = arith.constant 0 : index
    %c0_12 = arith.constant 0 : index
    %13 = vector.load %arg7[%c0_10, %c0_11, %c0_12] : memref<1x8x128xf32, #tpu.memory_space<vmem>>, vector<1x1x128xf32>
    %14 = vector.shape_cast %12 : vector<1x128xf32> to vector<1x1x128xf32>
    %15 = arith.addf %13, %14 : vector<1x1x128xf32>
    %c0_13 = arith.constant 0 : index
    %c0_14 = arith.constant 0 : index
    %c0_15 = arith.constant 0 : index
    %16 = vector.load %arg7[%c0_13, %c0_14, %c0_15] : memref<1x8x128xf32, #tpu.memory_space<vmem>>, vector<1x1x128xf32>
    tpu.vector_store %arg7[%c0_13, %c0_14, %c0_15], %15 {strides = array<i32>} : memref<1x8x128xf32, #tpu.memory_space<vmem>>, vector<1x1x128xf32>,
    return
  }
  func.func @transform_0(%arg0: i32, %arg1: i32) -> (i32, i32) {
    %c1_i32 = arith.constant 1 : i32
    %0 = arith.muli %arg0, %c1_i32 : i32
    %1 = arith.addi %0, %arg1 : i32
    %c0_i32 = arith.constant 0 : i32
    %c0_i32_0 = arith.constant 0 : i32
    return %1, %c0_i32 : i32, i32
  }
  func.func @transform_1(%arg0: i32, %arg1: i32) -> (i32, i32) {
    %c1_i32 = arith.constant 1 : i32
    %0 = arith.muli %arg0, %c1_i32 : i32
    %1 = arith.addi %0, %arg1 : i32
    %c0_i32 = arith.constant 0 : i32
    %c0_i32_0 = arith.constant 0 : i32
    return %1, %c0_i32 : i32, i32
  }
  func.func @transform_2(%arg0: i32, %arg1: i32) -> (i32, i32) {
    %c1_i32 = arith.constant 1 : i32
    %0 = arith.muli %arg0, %c1_i32 : i32
    %1 = arith.addi %0, %arg1 : i32
    %c0_i32 = arith.constant 0 : i32
    %c0_i32_0 = arith.constant 0 : i32
    return %1, %c0_i32 : i32, i32
  }
  func.func @transform_3(%arg0: i32, %arg1: i32) -> (i32, i32) {
    %c1_i32 = arith.constant 1 : i32
    %0 = arith.muli %arg0, %c1_i32 : i32
    %1 = arith.addi %0, %arg1 : i32
    %c0_i32 = arith.constant 0 : i32
    %c0_i32_0 = arith.constant 0 : i32
    return %1, %c0_i32 : i32, i32
  }
  func.func @transform_4(%arg0: i32, %arg1: i32) -> (i32, i32) {
    %c1_i32 = arith.constant 1 : i32
    %0 = arith.muli %arg0, %c1_i32 : i32
    %1 = arith.addi %0, %arg1 : i32
    %c0_i32 = arith.constant 0 : i32
    %c0_i32_0 = arith.constant 0 : i32
    return %1, %c0_i32 : i32, i32
  }
  func.func @transform_5(%arg0: i32, %arg1: i32) -> (i32, i32, i32) {
    %c0_i32 = arith.constant 0 : i32
    %c0_i32_0 = arith.constant 0 : i32
    %c0_i32_1 = arith.constant 0 : i32
    return %arg0, %c0_i32, %c0_i32_0 : i32, i32, i32
  }
}

</mosaic_0001>

<llo_original>
// kernel: tpu_custom_call.1
$region0: #{tpu_custom_call.1}
  #allocation0 [shape = 'u32[]', space=smem, size = 0x4, offset = 0x4, fixed_abs, tag = 'smem constant byte address 0x4 - core index']
  #allocation1 [shape = 'u32[144,128]{1,0:T(1,128)}', space=vmem, size = 0x12000, scoped, tag = 'internal scratch']
  %s0 = inlined_call_operand.hbm [shape: f32[1,128], index: 0, kind: input, shape index: {}]
  %s1 = inlined_call_operand.vmem [shape: f32[1,128], index: 1, kind: input, shape index: {}]
  %s2 = inlined_call_operand.vmem [shape: f32[1,128], index: 2, kind: input, shape index: {}]
  %s3 = inlined_call_operand.vmem [shape: f32[1,128], index: 3, kind: input, shape index: {}]
  %s4 = inlined_call_operand.vmem [shape: f32[1,128], index: 4, kind: input, shape index: {}]
  %s5 = inlined_call_operand.hbm [shape: f32[1,8,128], index: 5, kind: output, shape index: {}]
  %s6 = sld [smem:[#allocation0]]
  $region38: #{tpu_custom_call.1} parent=0
    _
  %s8 = ssub.s32 1, %s6
  %s9 = scalar_select 0, %s8, %s6
  $region1: #{tpu_custom_call.1} parent=0
    #allocation2 [shape = 'u8[512]{0}', space=vmem, size = 0x400, scoped, tag = 'input window, operand 0, single buffered']
    #allocation3 [shape = 's32[1]{0}', space=sflag, size = 0x4, scoped, tag = 'scoped memory for tpu_custom_call.1']
    #allocation4 [shape = 's32[1]{0}', space=sflag, size = 0x4, scoped, tag = 'scoped memory for tpu_custom_call.1']
    #allocation5 [shape = 'u8[4096]{0}', space=vmem, size = 0x1000, scoped, tag = 'output window, operand 0, single buffered']
    %10 = vsyncpa [#allocation3], 0
    %11 = vsyncpa [#allocation4], 0
    // Predicated region
    $region2: #{tpu_custom_call.1} parent=1 // pred_check
      _
    $region3: #{tpu_custom_call.1} parent=1 // pred_check_branch
      %13 = sbr.rel (0) target = $region5
    $region4: #{tpu_custom_call.1} parent=1 // pred_region
      %s14 = sadd.s32 0, 0
      %s16 = ssub.s32 16, 16
      %17 = vsyncadd [#allocation3], %s16
      %s18 = smul.addr %s14, 16
      %s19 = scalar_lea.hbm %s0, %s18
      %s21 = sshll.u32 [#allocation2], 4
      %s22 = int_to_ptr.vmem [resolvable:$true] %s21
      %24 = dma.hbm_to_vmem [thread:$0]  %s19, 16, %s22, [#allocation3]
    $region5: #{tpu_custom_call.1} parent=1 // pred_fallthru
      _
    // Predicated region
    $region6: #{tpu_custom_call.1} parent=1 // pred_check
      _
    $region7: #{tpu_custom_call.1} parent=1 // pred_check_branch
      %26 = sbr.rel (0) target = $region9
    $region8: #{tpu_custom_call.1} parent=1 // pred_region
      %s27 = sadd.s32 0, 0
      %p28 = scmp.lt.s32.totalorder %s27, 0
      %s29 = scalar_select %p28, %s27, 0
      %s30 = scalar_lea.vmem %s1, %s29
      %s31 = sadd.s32 0, 0
    $region9: #{tpu_custom_call.1} parent=1 // pred_fallthru
      _
    // Predicated region
    $region10: #{tpu_custom_call.1} parent=1 // pred_check
      _
    $region11: #{tpu_custom_call.1} parent=1 // pred_check_branch
      %33 = sbr.rel (0) target = $region13
    $region12: #{tpu_custom_call.1} parent=1 // pred_region
      %s34 = sadd.s32 0, 0
      %p35 = scmp.lt.s32.totalorder %s34, 0
      %s36 = scalar_select %p35, %s34, 0
      %s37 = scalar_lea.vmem %s2, %s36
      %s38 = sadd.s32 0, 0
    $region13: #{tpu_custom_call.1} parent=1 // pred_fallthru
      _
    // Predicated region
    $region14: #{tpu_custom_call.1} parent=1 // pred_check
      _
    $region15: #{tpu_custom_call.1} parent=1 // pred_check_branch
      %40 = sbr.rel (0) target = $region17
    $region16: #{tpu_custom_call.1} parent=1 // pred_region
      %s41 = sadd.s32 0, 0
      %p42 = scmp.lt.s32.totalorder %s41, 0
      %s43 = scalar_select %p42, %s41, 0
      %s44 = scalar_lea.vmem %s3, %s43
      %s45 = sadd.s32 0, 0
    $region17: #{tpu_custom_call.1} parent=1 // pred_fallthru
      _
    // Predicated region
    $region18: #{tpu_custom_call.1} parent=1 // pred_check
      _
    $region19: #{tpu_custom_call.1} parent=1 // pred_check_branch
      %47 = sbr.rel (0) target = $region21
    $region20: #{tpu_custom_call.1} parent=1 // pred_region
      %s48 = sadd.s32 0, 0
      %p49 = scmp.lt.s32.totalorder %s48, 0
      %s50 = scalar_select %p49, %s48, 0
      %s51 = scalar_lea.vmem %s4, %s50
      %s52 = sadd.s32 0, 0
    $region21: #{tpu_custom_call.1} parent=1 // pred_fallthru
      _
    // Predicated region
    $region22: #{tpu_custom_call.1} parent=1 // pred_check
      _
    $region23: #{tpu_custom_call.1} parent=1 // pred_check_branch
      %54 = sbr.rel (0) target = $region25
    $region24: #{tpu_custom_call.1} parent=1 // pred_region
      %55 = dma.done [#allocation3], 16
    $region25: #{tpu_custom_call.1} parent=1 // pred_fallthru
      _
    %s56 = sadd.s32 0, 0
    %p57 = scmp.lt.s32.totalorder %s56, 0
    %s58 = scalar_select %p57, %s56, 0
    %s59 = scalar_lea.vmem %s1, %s58
    %s60 = sadd.s32 0, 0
    %p61 = scmp.lt.s32.totalorder %s60, 0
    %s62 = scalar_select %p61, %s60, 0
    %s63 = scalar_lea.vmem %s2, %s62
    %s64 = sadd.s32 0, 0
    %p65 = scmp.lt.s32.totalorder %s64, 0
    %s66 = scalar_select %p65, %s64, 0
    %s67 = scalar_lea.vmem %s3, %s66
    %s68 = sadd.s32 0, 0
    %p69 = scmp.lt.s32.totalorder %s68, 0
    %s70 = scalar_select %p69, %s68, 0
    %s71 = scalar_lea.vmem %s4, %s70
    %s72 = sadd.s32 0, 0
    %s73 = sadd.s32 0, 0
    %p74 = scmp.lt.s32.totalorder %s73, 0
    %s75 = scalar_select %p74, %s73, 0
    %s76 = scalar_lea.vmem %s1, %s75
    %s77 = sadd.s32 0, 0
    %s78 = sadd.s32 0, 0
    %p79 = scmp.lt.s32.totalorder %s78, 0
    %s80 = scalar_select %p79, %s78, 0
    %s81 = scalar_lea.vmem %s2, %s80
    %s82 = sadd.s32 0, 0
    %s83 = sadd.s32 0, 0
    %p84 = scmp.lt.s32.totalorder %s83, 0
    %s85 = scalar_select %p84, %s83, 0
    %s86 = scalar_lea.vmem %s3, %s85
    %s87 = sadd.s32 0, 0
    %s88 = sadd.s32 0, 0
    %p89 = scmp.lt.s32.totalorder %s88, 0
    %s90 = scalar_select %p89, %s88, 0
    %s91 = scalar_lea.vmem %s4, %s90
    %s92 = sadd.s32 0, 0
    %p93 = scmp.eq.s32.totalorder 0, 0
    // Predicated region
    $region26: #{tpu_custom_call.1} parent=1 // pred_check
      %p94 = pneg %p93
    $region27: #{tpu_custom_call.1} parent=1 // pred_check_branch
      %96 = sbr.rel (%p94) target = $region29
    $region28: #{tpu_custom_call.1} parent=1 // pred_region
      %97 = vst [vmem:[#allocation5] sm:$0xff] 0.0
    $region29: #{tpu_custom_call.1} parent=1 // pred_fallthru
      _
    %v98 = vld [vmem:[#allocation2] sm:$0x1]
    %v99 = vld [vmem:[%s76] sm:$0x1]
    %v100 = vld [vmem:[%s81] sm:$0x1]
    %v101 = vld [vmem:[%s86] sm:$0x1]
    %v102 = vld [vmem:[%s91] sm:$0x1]
    %v103 = vmul.f32 %v98, %v99
    %v104 = vmul.f32 %v101, %v101
    %v105 = vsub.f32 %v102, %v104
    %v106 = vmul.f32 %v100, %v105
    %v107 = vadd.f32 %v103, %v106
    %v108 = vld [vmem:[#allocation5] sm:$0x1]
    %v109 = vadd.f32 %v108, %v107
    %110 = vst [vmem:[#allocation5] sm:$0x1] %v109
    // Predicated region
    $region30: #{tpu_custom_call.1} parent=1 // pred_check
      _
    $region31: #{tpu_custom_call.1} parent=1 // pred_check_branch
      %112 = sbr.rel (0) target = $region33
    $region32: #{tpu_custom_call.1} parent=1 // pred_region
      %s114 = ssub.s32 128, 128
      %115 = vsyncadd [#allocation4], %s114
      %s117 = sshll.u32 [#allocation5], 4
      %s118 = int_to_ptr.vmem [resolvable:$true] %s117
      %120 = dma.vmem_to_hbm [thread:$0]  %s118, 128, %s5, [#allocation4]
    $region33: #{tpu_custom_call.1} parent=1 // pred_fallthru
      _
    // Predicated region
    $region34: #{tpu_custom_call.1} parent=1 // pred_check
      _
    $region35: #{tpu_custom_call.1} parent=1 // pred_check_branch
      %122 = sbr.rel (0) target = $region37
    $region36: #{tpu_custom_call.1} parent=1 // pred_region
      %123 = dma.done [#allocation4], 128
    $region37: #{tpu_custom_call.1} parent=1 // pred_fallthru
      _
    %124 = vsyncpa [#allocation3], 1
    %125 = vsyncpa [#allocation4], 1

</llo_original>
